<compile_context>
chip_gen: v7x
topology: tpu7x:2x2x1
jax: 0.10.0
libtpu: 0.0.40
codegen_flags: <defaults>
</compile_context>

<pallas_src>
import math

import jax
import jax.numpy as jnp
from jax.experimental import pallas as pl
from jax.experimental.pallas import tpu as pltpu


def _round_up(a, m):
    return ((a + m - 1) // m) * m


def noisy_linear_kernel(x_ref, wmu_ref, wsig_ref, ein_ref, onb_ref, o_ref,
                        acc_mu_ref, acc_sig_ref):
    """One (tm, tn) output tile; k (reduction) is the last grid axis.

    onb_ref rows: [0]=eps_out, [1]=bias_mu, [2]=bias_sigma  (packed, one DMA).
    """
    k = pl.program_id(2)

    @pl.when(k == 0)
    def _init():
        eps_out = onb_ref[0:1, :]                                   # (1, tn)
        bias = onb_ref[1:2, :] + onb_ref[2:3, :] * eps_out          # noisy bias
        acc_mu_ref[...] = jnp.broadcast_to(bias, acc_mu_ref.shape)  # fold bias in
        acc_sig_ref[...] = jnp.zeros_like(acc_sig_ref)

    x = x_ref[...]                                   # (tm, tk) f32
    xs = x * ein_ref[...]                            # eps_in scale, lane-aligned bcast
    wdt = wmu_ref.dtype                              # bf16 -> native MXU passes
    acc_mu_ref[...] += jnp.dot(x.astype(wdt), wmu_ref[...],
                               preferred_element_type=jnp.float32)
    acc_sig_ref[...] += jnp.dot(xs.astype(wdt), wsig_ref[...],
                                preferred_element_type=jnp.float32)

    @pl.when(k == pl.num_programs(2) - 1)
    def _fin():
        eps_out = onb_ref[0:1, :]
        o_ref[...] = (acc_mu_ref[...] + eps_out * acc_sig_ref[...]).astype(o_ref.dtype)


def prepare_noisy_linear(weight_mu, weight_sigma, bias_mu, bias_sigma,
                         eps_in, eps_out, weight_dtype=jnp.bfloat16):
    """Transpose to (in, out), cast and pad to lane multiples of 128 — ONCE."""
    out_f, in_f = weight_mu.shape
    K_pad = _round_up(in_f, 128)
    N_pad = _round_up(out_f, 128)

    def pad_w(w):
        wt = w.T.astype(weight_dtype)                # (in, out): MXU-native RHS layout
        if (in_f, out_f) == (K_pad, N_pad):
            return wt
        return jnp.zeros((K_pad, N_pad), weight_dtype).at[:in_f, :out_f].set(wt)

    ein = jnp.zeros((1, K_pad), jnp.float32).at[0, :in_f].set(
        eps_in.astype(jnp.float32))
    onb = (jnp.zeros((3, N_pad), jnp.float32)
           .at[0, :out_f].set(eps_out.astype(jnp.float32))
           .at[1, :out_f].set(bias_mu.astype(jnp.float32))
           .at[2, :out_f].set(bias_sigma.astype(jnp.float32)))

    return dict(wmu=pad_w(weight_mu), wsig=pad_w(weight_sigma),
                ein=ein, onb=onb, in_features=in_f, out_features=out_f)


def noisy_linear(x, prepared, *, tm=256, tn=256, tk=1024):
    """x: (B, in_features) f32.  `prepared` = output of prepare_noisy_linear."""
    B, in_f = x.shape
    assert in_f == prepared["in_features"]
    out_f = prepared["out_features"]
    K_pad, N_pad = prepared["wmu"].shape

    # Tiles: sublane multiple of 8 on M; 128-multiples dividing the padded K/N.
    tm = min(tm, _round_up(B, 8))
    tk = min(tk, K_pad)
    while K_pad % tk:
        tk -= 128
    tn = min(tn, N_pad)
    while N_pad % tn:
        tn -= 128
    B_pad = _round_up(B, tm)

    # Only the (cheap) activation is padded per call, and only when needed.
    if (B_pad, K_pad) == (B, in_f):
        xp = x
    else:
        xp = jnp.zeros((B_pad, K_pad), x.dtype).at[:B, :in_f].set(x)

    grid = (B_pad // tm, N_pad // tn, K_pad // tk)

    out_pad = pl.pallas_call(
        noisy_linear_kernel,
        out_shape=jax.ShapeDtypeStruct((B_pad, N_pad), jnp.float32),
        grid_spec=pltpu.PrefetchScalarGridSpec(
            num_scalar_prefetch=0,
            grid=grid,
            in_specs=[
                pl.BlockSpec((tm, tk), lambda i, j, k: (i, k)),   # x (f32)
                pl.BlockSpec((tk, tn), lambda i, j, k: (k, j)),   # weight_mu^T  (bf16)
                pl.BlockSpec((tk, tn), lambda i, j, k: (k, j)),   # weight_sigma^T (bf16)
                pl.BlockSpec((1, tk),  lambda i, j, k: (0, k)),   # eps_in  (1, K_pad)
                pl.BlockSpec((3, tn),  lambda i, j, k: (0, j)),   # [eps_out; bias_mu; bias_sigma]
            ],
            out_specs=pl.BlockSpec((tm, tn), lambda i, j, k: (i, j)),
            scratch_shapes=[pltpu.VMEM((tm, tn), jnp.float32),    # acc for x@Wmu (+bias)
                            pltpu.VMEM((tm, tn), jnp.float32)],   # acc for (x*ein)@Wsig
        ),
        compiler_params=pltpu.CompilerParams(
            dimension_semantics=("parallel", "parallel", "arbitrary")),
    )(xp, prepared["wmu"], prepared["wsig"], prepared["ein"], prepared["onb"])

    return out_pad[:B, :out_f]


def _scale_noise(key, size):
    # PyTorch: x = randn(size); x.sign() * x.abs().sqrt()
    x = jax.random.normal(key, (size,), dtype=jnp.float32)
    return jnp.sign(x) * jnp.sqrt(jnp.abs(x))


def init_noisy_linear(key, in_features, out_features, sigma_init=0.5,
                      weight_dtype=jnp.bfloat16):
    k_wmu, k_bmu, k_ein, k_eout = jax.random.split(key, 4)
    mu_range = 1.0 / math.sqrt(in_features)

    # PyTorch layout (out_features, in_features) for the raw parameters.
    weight_mu = jax.random.uniform(k_wmu, (out_features, in_features), jnp.float32,
                                   minval=-mu_range, maxval=mu_range)
    weight_sigma = jnp.full((out_features, in_features), 0.017, jnp.float32)
    bias_mu = jax.random.uniform(k_bmu, (out_features,), jnp.float32,
                                 minval=-mu_range, maxval=mu_range)
    bias_sigma = jnp.full((out_features,), 0.017, jnp.float32)

    # reset_noise(): factorized Gaussian noise kept as the two factor vectors.
    eps_in = _scale_noise(k_ein, in_features)      # (in,)
    eps_out = _scale_noise(k_eout, out_features)   # (out,)  (== bias_epsilon)

    raw = dict(weight_mu=weight_mu, weight_sigma=weight_sigma,
               bias_mu=bias_mu, bias_sigma=bias_sigma,
               eps_in=eps_in, eps_out=eps_out)
    prepared = prepare_noisy_linear(weight_mu, weight_sigma, bias_mu, bias_sigma,
                                    eps_in, eps_out, weight_dtype=weight_dtype)
    return raw, prepared


def reference_forward_quantized(x, raw, weight_dtype=jnp.bfloat16):
    """Same math as the kernel, with the bf16 casts mirrored (tight check)."""
    wmu_t = raw["weight_mu"].T.astype(weight_dtype).astype(jnp.float32)
    wsig_t = raw["weight_sigma"].T.astype(weight_dtype).astype(jnp.float32)
    xb = x.astype(weight_dtype).astype(jnp.float32)
    xs = (x * raw["eps_in"][None, :]).astype(weight_dtype).astype(jnp.float32)
    hi = jax.lax.Precision.HIGHEST
    return (jnp.dot(xb, wmu_t, precision=hi)
            + raw["eps_out"][None, :] * jnp.dot(xs, wsig_t, precision=hi)
            + raw["bias_mu"][None, :]
            + raw["bias_sigma"][None, :] * raw["eps_out"][None, :])


if __name__ == "__main__":
    key = jax.random.PRNGKey(0)
    k_param, k_x = jax.random.split(key)

    batch, in_features, out_features = 8, 64, 32
    raw, prepared = init_noisy_linear(k_param, in_features, out_features)
    x = jax.random.normal(k_x, (batch, in_features), dtype=jnp.float32)

    out = noisy_linear(x, prepared)
    out = jax.block_until_ready(out)
    assert out.shape == (batch, out_features)

    # Tight check against the same math with bf16 casts mirrored.
    ref_q = reference_forward_quantized(x, raw)
    assert jnp.allclose(out, ref_q, atol=1e-3, rtol=1e-3), \
        "mismatch vs quantization-mirrored reference"

    # Module-level (pure f32 PyTorch semantics) check; loose tol for bf16 weights.
    w = raw["weight_mu"] + raw["weight_sigma"] * jnp.outer(raw["eps_out"], raw["eps_in"])
    b = raw["bias_mu"] + raw["bias_sigma"] * raw["eps_out"]
    ref_f32 = x @ w.T + b
    assert jnp.allclose(out, ref_f32, atol=2e-2, rtol=2e-2), \
        "mismatch vs f32 module reference"

    print("KERNEL_OK")
</pallas_src>

<mosaic_0001>
module attributes {stable_mosaic.version = 11 : i64} {
  func.func @noisy_linear_kernel(%arg0: i32, %arg1: i32, %arg2: i32, %arg3: memref<8x128xf32, #tpu.memory_space<vmem>>, %arg4: memref<128x128xbf16, #tpu.memory_space<vmem>>, %arg5: memref<128x128xbf16, #tpu.memory_space<vmem>>, %arg6: memref<1x128xf32, #tpu.memory_space<vmem>>, %arg7: memref<3x128xf32, #tpu.memory_space<vmem>>, %arg8: memref<8x128xf32, #tpu.memory_space<vmem>>, %arg9: memref<8x128xf32, #tpu.memory_space<vmem>>, %arg10: memref<8x128xf32, #tpu.memory_space<vmem>>) attributes {dimension_semantics = [#tpu.dimension_semantics<parallel>, #tpu.dimension_semantics<parallel>, #tpu.dimension_semantics<arbitrary>], iteration_bounds = array<i64: 1, 1, 1>, scalar_prefetch = 0 : i64, scratch_operands = 2 : i64, tpu.core_type = #tpu.core_type<tc>, window_params = [{transform_indices = @transform_0, window_bounds = array<i64: 8, 128>}, {transform_indices = @transform_1, window_bounds = array<i64: 128, 128>}, {transform_indices = @transform_2, window_bounds = array<i64: 128, 128>}, {transform_indices = @transform_3, window_bounds = array<i64: 1, 128>}, {transform_indices = @transform_4, window_bounds = array<i64: 3, 128>}, {transform_indices = @transform_5, window_bounds = array<i64: 8, 128>}]} {
    %c0_i32 = arith.constant 0 : i32
    %0 = arith.cmpi eq, %arg2, %c0_i32 : i32
    %1 = arith.extui %0 : i1 to i32
    %c0_i32_0 = arith.constant 0 : i32
    %2 = arith.cmpi ne, %1, %c0_i32_0 : i32
    scf.if %2 {
      %c0_19 = arith.constant 0 : index
      %c0_20 = arith.constant 0 : index
      %22 = vector.load %arg7[%c0_19, %c0_20] : memref<3x128xf32, #tpu.memory_space<vmem>>, vector<1x128xf32>
      %c1 = arith.constant 1 : index
      %c0_21 = arith.constant 0 : index
      %23 = vector.load %arg7[%c1, %c0_21] : memref<3x128xf32, #tpu.memory_space<vmem>>, vector<1x128xf32>
      %c2 = arith.constant 2 : index
      %c0_22 = arith.constant 0 : index
      %24 = vector.load %arg7[%c2, %c0_22] : memref<3x128xf32, #tpu.memory_space<vmem>>, vector<1x128xf32>
      %25 = arith.mulf %24, %22 : vector<1x128xf32>
      %26 = arith.addf %23, %25 : vector<1x128xf32>
      %27 = vector.shape_cast %26 : vector<1x128xf32> to vector<1x128xf32>
      %28 = vector.broadcast %27 : vector<1x128xf32> to vector<8x128xf32>
      %c0_23 = arith.constant 0 : index
      %c0_24 = arith.constant 0 : index
      %29 = vector.load %arg9[%c0_23, %c0_24] : memref<8x128xf32, #tpu.memory_space<vmem>>, vector<8x128xf32>
      tpu.vector_store %arg9[%c0_23, %c0_24], %28 {strides = array<i32>} : memref<8x128xf32, #tpu.memory_space<vmem>>, vector<8x128xf32>,
      %cst_25 = arith.constant 0.000000e+00 : f32
      %30 = vector.broadcast %cst_25 : f32 to vector<8x128xf32>
      %c0_26 = arith.constant 0 : index
      %c0_27 = arith.constant 0 : index
      %31 = vector.load %arg10[%c0_26, %c0_27] : memref<8x128xf32, #tpu.memory_space<vmem>>, vector<8x128xf32>
      tpu.vector_store %arg10[%c0_26, %c0_27], %30 {strides = array<i32>} : memref<8x128xf32, #tpu.memory_space<vmem>>, vector<8x128xf32>,
    } else {
    }
    %c0 = arith.constant 0 : index
    %c0_1 = arith.constant 0 : index
    %3 = vector.load %arg3[%c0, %c0_1] : memref<8x128xf32, #tpu.memory_space<vmem>>, vector<8x128xf32>
    %c0_2 = arith.constant 0 : index
    %c0_3 = arith.constant 0 : index
    %4 = vector.load %arg6[%c0_2, %c0_3] : memref<1x128xf32, #tpu.memory_space<vmem>>, vector<1x128xf32>
    %5 = vector.broadcast %4 : vector<1x128xf32> to vector<8x128xf32>
    %6 = arith.mulf %3, %5 : vector<8x128xf32>
    %c0_4 = arith.constant 0 : index
    %c0_5 = arith.constant 0 : index
    %7 = vector.load %arg9[%c0_4, %c0_5] : memref<8x128xf32, #tpu.memory_space<vmem>>, vector<8x128xf32>
    %8 = arith.truncf %3 : vector<8x128xf32> to vector<8x128xbf16>
    %c0_6 = arith.constant 0 : index
    %c0_7 = arith.constant 0 : index
    %9 = vector.load %arg4[%c0_6, %c0_7] : memref<128x128xbf16, #tpu.memory_space<vmem>>, vector<128x128xbf16>
    %cst = arith.constant dense<0.000000e+00> : vector<8x128xf32>
    %10 = tpu.matmul %8, %9, %cst {dimension_numbers = #tpu.dot_dimension_numbers<[1], [0], [0], [1], [0, 0, 1, 1], [], []>} : vector<8x128xbf16>, vector<128x128xbf16>, vector<8x128xf32> -> vector<8x128xf32>
    %11 = arith.addf %7, %10 : vector<8x128xf32>
    %c0_8 = arith.constant 0 : index
    %c0_9 = arith.constant 0 : index
    %12 = vector.load %arg9[%c0_8, %c0_9] : memref<8x128xf32, #tpu.memory_space<vmem>>, vector<8x128xf32>
    tpu.vector_store %arg9[%c0_8, %c0_9], %11 {strides = array<i32>} : memref<8x128xf32, #tpu.memory_space<vmem>>, vector<8x128xf32>,
    %c0_10 = arith.constant 0 : index
    %c0_11 = arith.constant 0 : index
    %13 = vector.load %arg10[%c0_10, %c0_11] : memref<8x128xf32, #tpu.memory_space<vmem>>, vector<8x128xf32>
    %14 = arith.truncf %6 : vector<8x128xf32> to vector<8x128xbf16>
    %c0_12 = arith.constant 0 : index
    %c0_13 = arith.constant 0 : index
    %15 = vector.load %arg5[%c0_12, %c0_13] : memref<128x128xbf16, #tpu.memory_space<vmem>>, vector<128x128xbf16>
    %cst_14 = arith.constant dense<0.000000e+00> : vector<8x128xf32>
    %16 = tpu.matmul %14, %15, %cst_14 {dimension_numbers = #tpu.dot_dimension_numbers<[1], [0], [0], [1], [0, 0, 1, 1], [], []>} : vector<8x128xbf16>, vector<128x128xbf16>, vector<8x128xf32> -> vector<8x128xf32>
    %17 = arith.addf %13, %16 : vector<8x128xf32>
    %c0_15 = arith.constant 0 : index
    %c0_16 = arith.constant 0 : index
    %18 = vector.load %arg10[%c0_15, %c0_16] : memref<8x128xf32, #tpu.memory_space<vmem>>, vector<8x128xf32>
    tpu.vector_store %arg10[%c0_15, %c0_16], %17 {strides = array<i32>} : memref<8x128xf32, #tpu.memory_space<vmem>>, vector<8x128xf32>,
    %c0_i32_17 = arith.constant 0 : i32
    %19 = arith.cmpi eq, %arg2, %c0_i32_17 : i32
    %20 = arith.extui %19 : i1 to i32
    %c0_i32_18 = arith.constant 0 : i32
    %21 = arith.cmpi ne, %20, %c0_i32_18 : i32
    scf.if %21 {
      %c0_19 = arith.constant 0 : index
      %c0_20 = arith.constant 0 : index
      %22 = vector.load %arg7[%c0_19, %c0_20] : memref<3x128xf32, #tpu.memory_space<vmem>>, vector<1x128xf32>
      %c0_21 = arith.constant 0 : index
      %c0_22 = arith.constant 0 : index
      %23 = vector.load %arg9[%c0_21, %c0_22] : memref<8x128xf32, #tpu.memory_space<vmem>>, vector<8x128xf32>
      %c0_23 = arith.constant 0 : index
      %c0_24 = arith.constant 0 : index
      %24 = vector.load %arg10[%c0_23, %c0_24] : memref<8x128xf32, #tpu.memory_space<vmem>>, vector<8x128xf32>
      %25 = vector.broadcast %22 : vector<1x128xf32> to vector<8x128xf32>
      %26 = arith.mulf %25, %24 : vector<8x128xf32>
      %27 = arith.addf %23, %26 : vector<8x128xf32>
      %c0_25 = arith.constant 0 : index
      %c0_26 = arith.constant 0 : index
      %28 = vector.load %arg8[%c0_25, %c0_26] : memref<8x128xf32, #tpu.memory_space<vmem>>, vector<8x128xf32>
      tpu.vector_store %arg8[%c0_25, %c0_26], %27 {strides = array<i32>} : memref<8x128xf32, #tpu.memory_space<vmem>>, vector<8x128xf32>,
    } else {
    }
    return
  }
  func.func @transform_0(%arg0: i32, %arg1: i32, %arg2: i32) -> (i32, i32) {
    %c0_i32 = arith.constant 0 : i32
    return %arg0, %arg2 : i32, i32
  }
  func.func @transform_1(%arg0: i32, %arg1: i32, %arg2: i32) -> (i32, i32) {
    %c0_i32 = arith.constant 0 : i32
    return %arg2, %arg1 : i32, i32
  }
  func.func @transform_2(%arg0: i32, %arg1: i32, %arg2: i32) -> (i32, i32) {
    %c0_i32 = arith.constant 0 : i32
    return %arg2, %arg1 : i32, i32
  }
  func.func @transform_3(%arg0: i32, %arg1: i32, %arg2: i32) -> (i32, i32) {
    %c0_i32 = arith.constant 0 : i32
    %c0_i32_0 = arith.constant 0 : i32
    return %c0_i32, %arg2 : i32, i32
  }
  func.func @transform_4(%arg0: i32, %arg1: i32, %arg2: i32) -> (i32, i32) {
    %c0_i32 = arith.constant 0 : i32
    %c0_i32_0 = arith.constant 0 : i32
    return %c0_i32, %arg1 : i32, i32
  }
  func.func @transform_5(%arg0: i32, %arg1: i32, %arg2: i32) -> (i32, i32) {
    %c0_i32 = arith.constant 0 : i32
    return %arg0, %arg1 : i32, i32
  }
}

</mosaic_0001>

<llo_original>
// kernel: tpu_custom_call.1
$region0: #{tpu_custom_call.1}
  #allocation0 [shape = 'u32[]', space=smem, size = 0x4, offset = 0x4, fixed_abs, tag = 'smem constant byte address 0x4 - core index']
  #allocation1 [shape = 'u32[144,128]{1,0:T(1,128)}', space=vmem, size = 0x12000, scoped, tag = 'internal scratch']
  #allocation2 [shape = 'f32[8,128]{1,0:T(8,128)}', space=vmem, size = 0x1000, scoped, tag = 'scratch operand']
  #allocation3 [shape = 'f32[8,128]{1,0:T(8,128)}', space=vmem, size = 0x1000, scoped, tag = 'scratch operand']
  %s0 = inlined_call_operand.hbm [shape: f32[8,128], index: 0, kind: input, shape index: {}]
  %s1 = inlined_call_operand.hbm [shape: bf16[128,128], index: 1, kind: input, shape index: {}]
  %s2 = inlined_call_operand.hbm [shape: bf16[128,128], index: 2, kind: input, shape index: {}]
  %s3 = inlined_call_operand.vmem [shape: f32[1,128], index: 3, kind: input, shape index: {}]
  %s4 = inlined_call_operand.vmem [shape: f32[3,128], index: 4, kind: input, shape index: {}]
  %s5 = inlined_call_operand.hbm [shape: f32[8,128], index: 5, kind: output, shape index: {}]
  %s6 = sld [smem:[#allocation0]]
  $region50: #{tpu_custom_call.1} parent=0
    _
  %s8 = ssub.s32 1, %s6
  %s9 = scalar_select 0, %s8, %s6
  $region1: #{tpu_custom_call.1} parent=0
    #allocation4 [shape = 'u8[4096]{0}', space=vmem, size = 0x1000, scoped, tag = 'input window, operand 0, single buffered']
    #allocation5 [shape = 's32[1]{0}', space=sflag, size = 0x4, scoped, tag = 'scoped memory for tpu_custom_call.1']
    #allocation6 [shape = 's32[1]{0}', space=sflag, size = 0x4, scoped, tag = 'scoped memory for tpu_custom_call.1']
    #allocation7 [shape = 'u8[32768]{0}', space=vmem, size = 0x8000, scoped, tag = 'input window, operand 1, single buffered']
    #allocation8 [shape = 's32[1]{0}', space=sflag, size = 0x4, scoped, tag = 'scoped memory for tpu_custom_call.1']
    #allocation9 [shape = 'u8[32768]{0}', space=vmem, size = 0x8000, scoped, tag = 'input window, operand 2, single buffered']
    #allocation10 [shape = 'u8[4096]{0}', space=vmem, size = 0x1000, scoped, tag = 'output window, operand 0, single buffered']
    %10 = vsyncpa [#allocation5], 0
    %11 = vsyncpa [#allocation8], 0
    %12 = vsyncpa [#allocation6], 0
    // Predicated region
    $region2: #{tpu_custom_call.1} parent=1 // pred_check
      _
    $region3: #{tpu_custom_call.1} parent=1 // pred_check_branch
      %14 = sbr.rel (0) target = $region5
    $region4: #{tpu_custom_call.1} parent=1 // pred_region
      %s16 = ssub.s32 128, 128
      %17 = vsyncadd [#allocation5], %s16
      %s19 = sshll.u32 [#allocation4], 4
      %s20 = int_to_ptr.vmem [resolvable:$true] %s19
      %22 = dma.hbm_to_vmem [thread:$0]  %s0, 128, %s20, [#allocation5]
    $region5: #{tpu_custom_call.1} parent=1 // pred_fallthru
      _
    // Predicated region
    $region6: #{tpu_custom_call.1} parent=1 // pred_check
      _
    $region7: #{tpu_custom_call.1} parent=1 // pred_check_branch
      %24 = sbr.rel (0) target = $region9
    $region8: #{tpu_custom_call.1} parent=1 // pred_region
      %s26 = ssub.s32 1024, 1024
      %27 = vsyncadd [#allocation8], %s26
      %s28 = sshll.u32 [#allocation7], 4
      %s29 = int_to_ptr.vmem [resolvable:$true] %s28
      %34 = dma.hbm_to_vmem [thread:$0]  %s1, 1024, %s29, [#allocation8], 64, 64, 4
    $region9: #{tpu_custom_call.1} parent=1 // pred_fallthru
      _
    // Predicated region
    $region10: #{tpu_custom_call.1} parent=1 // pred_check
      _
    $region11: #{tpu_custom_call.1} parent=1 // pred_check_branch
      %36 = sbr.rel (0) target = $region13
    $region12: #{tpu_custom_call.1} parent=1 // pred_region
      %s38 = ssub.s32 1024, 1024
      %39 = vsyncadd [#allocation8], %s38
      %s40 = sshll.u32 [#allocation9], 4
      %s41 = int_to_ptr.vmem [resolvable:$true] %s40
      %46 = dma.hbm_to_vmem [thread:$0]  %s2, 1024, %s41, [#allocation8], 64, 64, 4
    $region13: #{tpu_custom_call.1} parent=1 // pred_fallthru
      _
    // Predicated region
    $region14: #{tpu_custom_call.1} parent=1 // pred_check
      _
    $region15: #{tpu_custom_call.1} parent=1 // pred_check_branch
      %48 = sbr.rel (0) target = $region17
    $region16: #{tpu_custom_call.1} parent=1 // pred_region
      _
    $region17: #{tpu_custom_call.1} parent=1 // pred_fallthru
      _
    // Predicated region
    $region18: #{tpu_custom_call.1} parent=1 // pred_check
      _
    $region19: #{tpu_custom_call.1} parent=1 // pred_check_branch
      %50 = sbr.rel (0) target = $region21
    $region20: #{tpu_custom_call.1} parent=1 // pred_region
      _
    $region21: #{tpu_custom_call.1} parent=1 // pred_fallthru
      _
    // Predicated region
    $region22: #{tpu_custom_call.1} parent=1 // pred_check
      _
    $region23: #{tpu_custom_call.1} parent=1 // pred_check_branch
      %52 = sbr.rel (0) target = $region25
    $region24: #{tpu_custom_call.1} parent=1 // pred_region
      %53 = dma.done [#allocation5], 128
    $region25: #{tpu_custom_call.1} parent=1 // pred_fallthru
      _
    // Predicated region
    $region26: #{tpu_custom_call.1} parent=1 // pred_check
      _
    $region27: #{tpu_custom_call.1} parent=1 // pred_check_branch
      %55 = sbr.rel (0) target = $region29
    $region28: #{tpu_custom_call.1} parent=1 // pred_region
      %56 = dma.done [#allocation8], 1024
    $region29: #{tpu_custom_call.1} parent=1 // pred_fallthru
      _
    // Predicated region
    $region30: #{tpu_custom_call.1} parent=1 // pred_check
      _
    $region31: #{tpu_custom_call.1} parent=1 // pred_check_branch
      %58 = sbr.rel (0) target = $region33
    $region32: #{tpu_custom_call.1} parent=1 // pred_region
      %59 = dma.done [#allocation8], 1024
    $region33: #{tpu_custom_call.1} parent=1 // pred_fallthru
      _
    %p61 = scmp.eq.s32.totalorder 0, 0
    // Predicated region
    $region34: #{tpu_custom_call.1} parent=1 // pred_check
      %p62 = pneg %p61
    $region35: #{tpu_custom_call.1} parent=1 // pred_check_branch
      %64 = sbr.rel (%p62) target = $region37
    $region36: #{tpu_custom_call.1} parent=1 // pred_region
      %v65 = vld [vmem:[%s4] sm:$0x1]
      %v66 = vld [vmem:[%s4 + $0x1] sm:$0x1]
      %v67 = vld [vmem:[%s4 + $0x2] sm:$0x1]
      %v68 = vmul.f32 %v67, %v65
      %v69 = vadd.f32 %v66, %v68
      %v70 = vlaneseq
      %v71 = vshrl.u32 %v70, 7
      %v72 = vsub.s32 0, %v71
      %v73 = vrot.slane %v69, %v72
      %74 = vst [vmem:[#allocation2] sm:$0xff] %v73
      %75 = vst [vmem:[#allocation3] sm:$0xff] 0.0
    $region37: #{tpu_custom_call.1} parent=1 // pred_fallthru
      _
    %v76 = vld [vmem:[#allocation4] sm:$0xff]
    %v77 = vld [vmem:[%s3] sm:$0x1]
    %v79 = vlaneseq
    %v80 = vshrl.u32 %v79, 7
    %v81 = vsub.s32 0, %v80
    %v82 = vrot.slane %v77, %v81
    %v84 = vmul.f32 %v76, %v82
    %v85 = vld [vmem:[#allocation2] sm:$0xff]
    %v86 = vpack.c.bf16 %v76, %v76
    %v87 = vld [vmem:[#allocation7] sm:$0xf]
    %v88 = vld [vmem:[#allocation7 + $0x4] sm:$0xf]
    %v89 = vld [vmem:[#allocation7 + $0x8] sm:$0xf]
    %v90 = vld [vmem:[#allocation7 + $0xc] sm:$0xf]
    %v91 = vld [vmem:[#allocation7 + $0x10] sm:$0xf]
    %v92 = vld [vmem:[#allocation7 + $0x14] sm:$0xf]
    %v93 = vld [vmem:[#allocation7 + $0x18] sm:$0xf]
    %v94 = vld [vmem:[#allocation7 + $0x1c] sm:$0xf]
    %v95 = vld [vmem:[#allocation7 + $0x20] sm:$0xf]
    %v96 = vld [vmem:[#allocation7 + $0x24] sm:$0xf]
    %v97 = vld [vmem:[#allocation7 + $0x28] sm:$0xf]
    %v98 = vld [vmem:[#allocation7 + $0x2c] sm:$0xf]
    %v99 = vld [vmem:[#allocation7 + $0x30] sm:$0xf]
    %v100 = vld [vmem:[#allocation7 + $0x34] sm:$0xf]
    %v101 = vld [vmem:[#allocation7 + $0x38] sm:$0xf]
    %v102 = vld [vmem:[#allocation7 + $0x3c] sm:$0xf]
    %v119 = vunpack.c.l.b16 %v87
    %v120 = vunpack.c.l.b16 %v88
    %v121 = vunpack.c.l.b16 %v89
    %v122 = vunpack.c.l.b16 %v90
    %v123 = vunpack.c.l.b16 %v91
    %v124 = vunpack.c.l.b16 %v92
    %v125 = vunpack.c.l.b16 %v93
    %v126 = vunpack.c.l.b16 %v94
    %v127 = vunpack.c.l.b16 %v95
    %v128 = vunpack.c.l.b16 %v96
    %v129 = vunpack.c.l.b16 %v97
    %v130 = vunpack.c.l.b16 %v98
    %v131 = vunpack.c.l.b16 %v99
    %v132 = vunpack.c.l.b16 %v100
    %v133 = vunpack.c.l.b16 %v101
    %v134 = vunpack.c.l.b16 %v102
    %v135 = vpack.c.b16 %v120, %v119
    %v136 = vpack.c.b16 %v122, %v121
    %v137 = vpack.c.b16 %v124, %v123
    %v138 = vpack.c.b16 %v126, %v125
    %v139 = vpack.c.b16 %v128, %v127
    %v140 = vpack.c.b16 %v130, %v129
    %v141 = vpack.c.b16 %v132, %v131
    %v142 = vpack.c.b16 %v134, %v133
    %151 = vmatprep.subr.bf16.mxu0 0
    %152 = vmatpush1.bf16.msra.mxu0 %v135
    %153 = vmatprep.subr.bf16.mxu0 0
    %154 = vmatpush1.bf16.msra.mxu0 %v136
    %155 = vmatprep.subr.bf16.mxu0 0
    %156 = vmatpush1.bf16.msra.mxu0 %v137
    %157 = vmatprep.subr.bf16.mxu0 0
    %158 = vmatpush1.bf16.msra.mxu0 %v138
    %159 = vmatprep.subr.bf16.mxu0 0
    %160 = vmatpush1.bf16.msra.mxu0 %v139
    %161 = vmatprep.subr.bf16.mxu0 0
    %162 = vmatpush1.bf16.msra.mxu0 %v140
    %163 = vmatprep.subr.bf16.mxu0 0
    %164 = vmatpush1.bf16.msra.mxu0 %v141
    %165 = vmatprep.subr.bf16.mxu0 0
    %166 = vmatpush1.bf16.msra.mxu0 %v142
    %167 = vmatprep.subr.bf16.mxu0 0
    %168 = vmatpush1.bf16.msra.mxu0 0
    %169 = vmatprep.subr.bf16.mxu0 0
    %170 = vmatpush1.bf16.msra.mxu0 0
    %171 = vmatprep.subr.bf16.mxu0 0
    %172 = vmatpush1.bf16.msra.mxu0 0
    %173 = vmatprep.subr.bf16.mxu0 0
    %174 = vmatpush1.bf16.msra.mxu0 0
    %175 = vmatprep.subr.bf16.mxu0 0
    %176 = vmatpush1.bf16.msra.mxu0 0
    %177 = vmatprep.subr.bf16.mxu0 0
    %178 = vmatpush1.bf16.msra.mxu0 0
    %179 = vmatprep.subr.bf16.mxu0 0
    %180 = vmatpush1.bf16.msra.mxu0 0
    %181 = vmatprep.subr.bf16.mxu0 0
    %182 = vmatpush1.bf16.msra.mxu0 0
    %183 = vmatprep.mubr.bf16.mxu0 0
    %184 = vmatmul.mubr.bf16.gmra.mrb[0].mxu0 %v86
    %v185 = vpop.f32.mrb[0].mxu0
    %v186 = vadd.f32 0.0, %v185
    %v187 = vpop.f32.mrb[0].mxu0
    %v188 = vpop.f32.mrb[0].mxu0
    %v189 = vpop.f32.mrb[0].mxu0
    %190 = vdwg.mxu0
    %v191 = vadd.f32 %v85, %v186
    %192 = vst [vmem:[#allocation2] sm:$0xff] %v191
    %v193 = vld [vmem:[#allocation3] sm:$0xff]
    %v194 = vpack.c.bf16 %v84, %v84
    %v195 = vld [vmem:[#allocation9] sm:$0xf]
    %v196 = vld [vmem:[#allocation9 + $0x4] sm:$0xf]
    %v197 = vld [vmem:[#allocation9 + $0x8] sm:$0xf]
    %v198 = vld [vmem:[#allocation9 + $0xc] sm:$0xf]
    %v199 = vld [vmem:[#allocation9 + $0x10] sm:$0xf]
    %v200 = vld [vmem:[#allocation9 + $0x14] sm:$0xf]
    %v201 = vld [vmem:[#allocation9 + $0x18] sm:$0xf]
    %v202 = vld [vmem:[#allocation9 + $0x1c] sm:$0xf]
    %v203 = vld [vmem:[#allocation9 + $0x20] sm:$0xf]
    %v204 = vld [vmem:[#allocation9 + $0x24] sm:$0xf]
    %v205 = vld [vmem:[#allocation9 + $0x28] sm:$0xf]
    %v206 = vld [vmem:[#allocation9 + $0x2c] sm:$0xf]
    %v207 = vld [vmem:[#allocation9 + $0x30] sm:$0xf]
    %v208 = vld [vmem:[#allocation9 + $0x34] sm:$0xf]
    %v209 = vld [vmem:[#allocation9 + $0x38] sm:$0xf]
    %v210 = vld [vmem:[#allocation9 + $0x3c] sm:$0xf]
    %v227 = vunpack.c.l.b16 %v195
    %v228 = vunpack.c.l.b16 %v196
    %v229 = vunpack.c.l.b16 %v197
    %v230 = vunpack.c.l.b16 %v198
    %v231 = vunpack.c.l.b16 %v199
    %v232 = vunpack.c.l.b16 %v200
    %v233 = vunpack.c.l.b16 %v201
    %v234 = vunpack.c.l.b16 %v202
    %v235 = vunpack.c.l.b16 %v203
    %v236 = vunpack.c.l.b16 %v204
    %v237 = vunpack.c.l.b16 %v205
    %v238 = vunpack.c.l.b16 %v206
    %v239 = vunpack.c.l.b16 %v207
    %v240 = vunpack.c.l.b16 %v208
    %v241 = vunpack.c.l.b16 %v209
    %v242 = vunpack.c.l.b16 %v210
    %v243 = vpack.c.b16 %v228, %v227
    %v244 = vpack.c.b16 %v230, %v229
    %v245 = vpack.c.b16 %v232, %v231
    %v246 = vpack.c.b16 %v234, %v233
    %v247 = vpack.c.b16 %v236, %v235
    %v248 = vpack.c.b16 %v238, %v237
    %v249 = vpack.c.b16 %v240, %v239
    %v250 = vpack.c.b16 %v242, %v241
    %259 = vmatprep.subr.bf16.mxu0 0
    %260 = vmatpush1.bf16.msra.mxu0 %v243
    %261 = vmatprep.subr.bf16.mxu0 0
    %262 = vmatpush1.bf16.msra.mxu0 %v244
    %263 = vmatprep.subr.bf16.mxu0 0
    %264 = vmatpush1.bf16.msra.mxu0 %v245
    %265 = vmatprep.subr.bf16.mxu0 0
    %266 = vmatpush1.bf16.msra.mxu0 %v246
    %267 = vmatprep.subr.bf16.mxu0 0
    %268 = vmatpush1.bf16.msra.mxu0 %v247
    %269 = vmatprep.subr.bf16.mxu0 0
    %270 = vmatpush1.bf16.msra.mxu0 %v248
    %271 = vmatprep.subr.bf16.mxu0 0
    %272 = vmatpush1.bf16.msra.mxu0 %v249
    %273 = vmatprep.subr.bf16.mxu0 0
    %274 = vmatpush1.bf16.msra.mxu0 %v250
    %275 = vmatprep.subr.bf16.mxu0 0
    %276 = vmatpush1.bf16.msra.mxu0 0
    %277 = vmatprep.subr.bf16.mxu0 0
    %278 = vmatpush1.bf16.msra.mxu0 0
    %279 = vmatprep.subr.bf16.mxu0 0
    %280 = vmatpush1.bf16.msra.mxu0 0
    %281 = vmatprep.subr.bf16.mxu0 0
    %282 = vmatpush1.bf16.msra.mxu0 0
    %283 = vmatprep.subr.bf16.mxu0 0
    %284 = vmatpush1.bf16.msra.mxu0 0
    %285 = vmatprep.subr.bf16.mxu0 0
    %286 = vmatpush1.bf16.msra.mxu0 0
    %287 = vmatprep.subr.bf16.mxu0 0
    %288 = vmatpush1.bf16.msra.mxu0 0
    %289 = vmatprep.subr.bf16.mxu0 0
    %290 = vmatpush1.bf16.msra.mxu0 0
    %291 = vmatprep.mubr.bf16.mxu0 0
    %292 = vmatmul.mubr.bf16.gmra.mrb[0].mxu0 %v194
    %v293 = vpop.f32.mrb[0].mxu0
    %v294 = vadd.f32 0.0, %v293
    %v295 = vpop.f32.mrb[0].mxu0
    %v296 = vpop.f32.mrb[0].mxu0
    %v297 = vpop.f32.mrb[0].mxu0
    %298 = vdwg.mxu0
    %v299 = vadd.f32 %v193, %v294
    %300 = vst [vmem:[#allocation3] sm:$0xff] %v299
    // Predicated region
    $region38: #{tpu_custom_call.1} parent=1 // pred_check
      %p301 = pneg %p61
    $region39: #{tpu_custom_call.1} parent=1 // pred_check_branch
      %303 = sbr.rel (%p301) target = $region41
    $region40: #{tpu_custom_call.1} parent=1 // pred_region
      %v304 = vld [vmem:[%s4] sm:$0x1]
      %v305 = vld [vmem:[#allocation2] sm:$0xff]
      %v306 = vld [vmem:[#allocation3] sm:$0xff]
      %v307 = vlaneseq
      %v308 = vshrl.u32 %v307, 7
      %v309 = vsub.s32 0, %v308
      %v310 = vrot.slane %v304, %v309
      %v311 = vmul.f32 %v310, %v306
      %v312 = vadd.f32 %v305, %v311
      %313 = vst [vmem:[#allocation10] sm:$0xff] %v312
    $region41: #{tpu_custom_call.1} parent=1 // pred_fallthru
      _
    // Predicated region
    $region42: #{tpu_custom_call.1} parent=1 // pred_check
      _
    $region43: #{tpu_custom_call.1} parent=1 // pred_check_branch
      %315 = sbr.rel (0) target = $region45
    $region44: #{tpu_custom_call.1} parent=1 // pred_region
      %s317 = ssub.s32 128, 128
      %318 = vsyncadd [#allocation6], %s317
      %s320 = sshll.u32 [#allocation10], 4
      %s321 = int_to_ptr.vmem [resolvable:$true] %s320
      %323 = dma.vmem_to_hbm [thread:$0]  %s321, 128, %s5, [#allocation6]
    $region45: #{tpu_custom_call.1} parent=1 // pred_fallthru
      _
    // Predicated region
    $region46: #{tpu_custom_call.1} parent=1 // pred_check
      _
    $region47: #{tpu_custom_call.1} parent=1 // pred_check_branch
      %325 = sbr.rel (0) target = $region49
    $region48: #{tpu_custom_call.1} parent=1 // pred_region
      %326 = dma.done [#allocation6], 128
    $region49: #{tpu_custom_call.1} parent=1 // pred_fallthru
      _
    %327 = vsyncpa [#allocation5], 1
    %328 = vsyncpa [#allocation8], 1
    %329 = vsyncpa [#allocation6], 1

</llo_original>
